<compile_context>
chip_gen: v7x
topology: tpu7x:2x2x1
jax: 0.10.0
libtpu: 0.0.40
codegen_flags: <defaults>
</compile_context>

<pallas_src>
import jax
import jax.numpy as jnp
from jax.experimental import pallas as pl
from jax.experimental.pallas import tpu as pltpu

IN_DIM = 256
OUT_DIMS = (256, 128, 128, 64, 32, 16)   # linear7, linear6, linear5, linear4, linear3, linear2
TOTAL_OUT = sum(OUT_DIMS)                # 624
TILE_B_MAX = 2048                        # ~20 MiB/step double-buffered (bf16 in, f32 out)
MIN_TILE_B = 8                           # sublane alignment
VMEM_LIMIT_BYTES = 40 * 1024 * 1024      # > v5e's 16 MiB default, << v7x's 64 MiB physical


def _round_up(x, m):
    return (x + m - 1) // m * m


def _cdiv(a, b):
    return -(-a // b)


def _choose_tile(batch, tile_max=TILE_B_MAX):
    """Adaptive batch tile: minimal padding, >=2 grid steps when batch allows (v7x megacore)."""
    n_steps = _cdiv(batch, tile_max)
    if batch >= 2 * MIN_TILE_B:
        n_steps = max(n_steps, 2)
    tile_b = _round_up(_cdiv(batch, n_steps), MIN_TILE_B)
    return int(min(max(tile_b, MIN_TILE_B), tile_max))


def anet_kernel(x_ref,
                w7_ref, w6_ref, w5_ref, w4_ref, w3_ref, w2_ref,
                b7_ref, b6_ref, b5_ref, b4_ref, b3_ref, b2_ref,
                o7_ref, o6_ref, o5_ref, o4_ref, o3_ref, o2_ref):
    """Six bf16 matmuls (f32 accumulate) + bias + ReLU, heads stored directly."""
    x = x_ref[...]                                     # (tile_b, 256) bf16
    w_refs = (w7_ref, w6_ref, w5_ref, w4_ref, w3_ref, w2_ref)
    b_refs = (b7_ref, b6_ref, b5_ref, b4_ref, b3_ref, b2_ref)
    o_refs = (o7_ref, o6_ref, o5_ref, o4_ref, o3_ref, o2_ref)
    for w_ref, b_ref, o_ref in zip(w_refs, b_refs, o_refs):
        y = jnp.dot(x, w_ref[...], preferred_element_type=jnp.float32)
        y = jnp.maximum(y + b_ref[...], 0.0)           # bias (1, C) broadcasts over rows
        o_ref[...] = y.astype(o_ref.dtype)


def make_params(key):
    """Deterministic init mimicking PyTorch's default Linear init U[-1/sqrt(fan_in), ...]."""
    params = []
    bound = 1.0 / jnp.sqrt(jnp.float32(IN_DIM))
    for i, c in enumerate(OUT_DIMS):
        kw, kb = jax.random.split(jax.random.fold_in(key, i))
        w = jax.random.uniform(kw, (IN_DIM, c), jnp.float32, -bound, bound)  # (in, out)
        b = jax.random.uniform(kb, (c,), jnp.float32, -bound, bound)
        params.append((w, b))
    return params


def anet_forward(x, params, tile_b_max=TILE_B_MAX):
    # Flatten to rows of 256 features, narrow the matmul operands to bf16.
    x2 = x.reshape(-1, IN_DIM).astype(jnp.bfloat16)
    batch = x2.shape[0]

    w_list = [w.astype(jnp.bfloat16) for w, _ in params]          # (256, C) bf16
    b_list = [b.astype(jnp.float32).reshape(1, -1) for _, b in params]  # (1, C) f32

    tile_b = _choose_tile(batch, tile_b_max)
    b_pad = _round_up(batch, tile_b)
    if b_pad != batch:
        x2 = jnp.pad(x2, ((0, b_pad - batch), (0, 0)))

    grid = (b_pad // tile_b,)

    cost = pl.CostEstimate(
        flops=2 * b_pad * IN_DIM * TOTAL_OUT,
        transcendentals=0,
        bytes_accessed=(b_pad * IN_DIM * 2                 # bf16 input
                        + IN_DIM * TOTAL_OUT * 2           # bf16 weights
                        + TOTAL_OUT * 4                    # f32 biases
                        + b_pad * TOTAL_OUT * 4),          # f32 outputs
    )

    in_specs = [pl.BlockSpec((tile_b, IN_DIM), lambda i: (i, 0))]        # batch-tiled input
    in_specs += [pl.BlockSpec((IN_DIM, c), lambda i: (0, 0)) for c in OUT_DIMS]  # weights: resident
    in_specs += [pl.BlockSpec((1, c), lambda i: (0, 0)) for c in OUT_DIMS]       # biases: resident
    out_specs = [pl.BlockSpec((tile_b, c), lambda i: (i, 0)) for c in OUT_DIMS]
    out_shape = [jax.ShapeDtypeStruct((b_pad, c), jnp.float32) for c in OUT_DIMS]

    outs = pl.pallas_call(
        anet_kernel,
        out_shape=out_shape,
        grid=grid,
        in_specs=in_specs,
        out_specs=out_specs,
        compiler_params=pltpu.CompilerParams(
            dimension_semantics=("parallel",),        # megacore-shard the batch grid (v7x)
            vmem_limit_bytes=VMEM_LIMIT_BYTES,        # 2048-row tile fits on v5e/v6e/v7x
        ),
        cost_estimate=cost,
    )(x2, *w_list, *b_list)

    # Glue: match .view(-1, C, 1, 1).  When the batch needed no padding this is
    # pure metadata (reshape of the kernel outputs); otherwise only a small
    # per-head row trim.
    result = []
    for o, c in zip(outs, OUT_DIMS):
        if b_pad != batch:
            o = o[:batch]
        result.append(o.reshape(batch, c, 1, 1))
    return tuple(result)


def anet_reference(x, params, operand_dtype=jnp.float32):
    """Pure-JAX reference; operand_dtype=bfloat16 reproduces the kernel's numerics."""
    x2 = x.reshape(-1, IN_DIM).astype(operand_dtype)
    batch = x2.shape[0]
    outs = []
    for (w, b), c in zip(params, OUT_DIMS):
        y = jnp.dot(x2, w.astype(operand_dtype), preferred_element_type=jnp.float32)
        y = jnp.maximum(y + b[None, :].astype(jnp.float32), 0.0)
        outs.append(y.reshape(batch, c, 1, 1))
    return tuple(outs)


if __name__ == "__main__":
    key = jax.random.PRNGKey(0)
    k_x, k_p = jax.random.split(key)

    # Small example input consistent with the module: numel divisible by 256.
    # (2, 4, 16, 16) -> 2048 elements -> 8 rows of 256 features.
    x = jax.random.normal(k_x, (2, 4, 16, 16), jnp.float32)
    params = make_params(k_p)

    outs = anet_forward(x, params)
    outs = jax.block_until_ready(outs)

    refs_matched = anet_reference(x, params, operand_dtype=jnp.bfloat16)  # same bf16 rounding
    refs_f32 = anet_reference(x, params, operand_dtype=jnp.float32)       # module-exact f32

    batch = x.size // IN_DIM
    for o, rm, rf, c in zip(outs, refs_matched, refs_f32, OUT_DIMS):
        assert o.shape == (batch, c, 1, 1), (o.shape, c)
        assert jnp.allclose(o, rm, atol=1e-3, rtol=1e-3), f"kernel mismatch for head {c}"
        assert jnp.allclose(o, rf, atol=5e-2, rtol=5e-2), f"bf16 drift too large for head {c}"

    print("KERNEL_OK")
</pallas_src>

<mosaic_0001>
module attributes {stable_mosaic.version = 11 : i64} {
  func.func @anet_kernel(%arg0: i32, %arg1: memref<8x256xbf16, #tpu.memory_space<vmem>>, %arg2: memref<256x256xbf16, #tpu.memory_space<vmem>>, %arg3: memref<256x128xbf16, #tpu.memory_space<vmem>>, %arg4: memref<256x128xbf16, #tpu.memory_space<vmem>>, %arg5: memref<256x64xbf16, #tpu.memory_space<vmem>>, %arg6: memref<256x32xbf16, #tpu.memory_space<vmem>>, %arg7: memref<256x16xbf16, #tpu.memory_space<vmem>>, %arg8: memref<1x256xf32, #tpu.memory_space<vmem>>, %arg9: memref<1x128xf32, #tpu.memory_space<vmem>>, %arg10: memref<1x128xf32, #tpu.memory_space<vmem>>, %arg11: memref<1x64xf32, #tpu.memory_space<vmem>>, %arg12: memref<1x32xf32, #tpu.memory_space<vmem>>, %arg13: memref<1x16xf32, #tpu.memory_space<vmem>>, %arg14: memref<8x256xf32, #tpu.memory_space<vmem>>, %arg15: memref<8x128xf32, #tpu.memory_space<vmem>>, %arg16: memref<8x128xf32, #tpu.memory_space<vmem>>, %arg17: memref<8x64xf32, #tpu.memory_space<vmem>>, %arg18: memref<8x32xf32, #tpu.memory_space<vmem>>, %arg19: memref<8x16xf32, #tpu.memory_space<vmem>>) attributes {dimension_semantics = [#tpu.dimension_semantics<parallel>], iteration_bounds = array<i64: 1>, scalar_prefetch = 0 : i64, scratch_operands = 0 : i64, tpu.core_type = #tpu.core_type<tc>, window_params = [{transform_indices = @transform_0, window_bounds = array<i64: 8, 256>}, {pipeline_mode = #tpu.pipeline_mode<synchronous>, transform_indices = @transform_1, window_bounds = array<i64: 256, 256>}, {pipeline_mode = #tpu.pipeline_mode<synchronous>, transform_indices = @transform_2, window_bounds = array<i64: 256, 128>}, {pipeline_mode = #tpu.pipeline_mode<synchronous>, transform_indices = @transform_3, window_bounds = array<i64: 256, 128>}, {pipeline_mode = #tpu.pipeline_mode<synchronous>, transform_indices = @transform_4, window_bounds = array<i64: 256, 64>}, {pipeline_mode = #tpu.pipeline_mode<synchronous>, transform_indices = @transform_5, window_bounds = array<i64: 256, 32>}, {pipeline_mode = #tpu.pipeline_mode<synchronous>, transform_indices = @transform_6, window_bounds = array<i64: 256, 16>}, {pipeline_mode = #tpu.pipeline_mode<synchronous>, transform_indices = @transform_7, window_bounds = array<i64: 1, 256>}, {pipeline_mode = #tpu.pipeline_mode<synchronous>, transform_indices = @transform_8, window_bounds = array<i64: 1, 128>}, {pipeline_mode = #tpu.pipeline_mode<synchronous>, transform_indices = @transform_9, window_bounds = array<i64: 1, 128>}, {pipeline_mode = #tpu.pipeline_mode<synchronous>, transform_indices = @transform_10, window_bounds = array<i64: 1, 64>}, {pipeline_mode = #tpu.pipeline_mode<synchronous>, transform_indices = @transform_11, window_bounds = array<i64: 1, 32>}, {pipeline_mode = #tpu.pipeline_mode<synchronous>, transform_indices = @transform_12, window_bounds = array<i64: 1, 16>}, {transform_indices = @transform_13, window_bounds = array<i64: 8, 256>}, {transform_indices = @transform_14, window_bounds = array<i64: 8, 128>}, {transform_indices = @transform_15, window_bounds = array<i64: 8, 128>}, {transform_indices = @transform_16, window_bounds = array<i64: 8, 64>}, {transform_indices = @transform_17, window_bounds = array<i64: 8, 32>}, {transform_indices = @transform_18, window_bounds = array<i64: 8, 16>}]} {
    %c0 = arith.constant 0 : index
    %c0_0 = arith.constant 0 : index
    %0 = vector.load %arg1[%c0, %c0_0] : memref<8x256xbf16, #tpu.memory_space<vmem>>, vector<8x256xbf16>
    %c0_1 = arith.constant 0 : index
    %c0_2 = arith.constant 0 : index
    %1 = vector.load %arg2[%c0_1, %c0_2] : memref<256x256xbf16, #tpu.memory_space<vmem>>, vector<256x256xbf16>
    %cst = arith.constant dense<0.000000e+00> : vector<8x256xf32>
    %2 = tpu.matmul %0, %1, %cst {dimension_numbers = #tpu.dot_dimension_numbers<[1], [0], [0], [1], [0, 0, 1, 1], [], []>} : vector<8x256xbf16>, vector<256x256xbf16>, vector<8x256xf32> -> vector<8x256xf32>
    %c0_3 = arith.constant 0 : index
    %c0_4 = arith.constant 0 : index
    %3 = vector.load %arg8[%c0_3, %c0_4] : memref<1x256xf32, #tpu.memory_space<vmem>>, vector<1x256xf32>
    %4 = vector.broadcast %3 : vector<1x256xf32> to vector<8x256xf32>
    %5 = arith.addf %2, %4 : vector<8x256xf32>
    %cst_5 = arith.constant 0.000000e+00 : f32
    %6 = vector.broadcast %cst_5 : f32 to vector<8x256xf32>
    %7 = arith.maximumf %5, %6 : vector<8x256xf32>
    %c0_6 = arith.constant 0 : index
    %c0_7 = arith.constant 0 : index
    %8 = vector.load %arg14[%c0_6, %c0_7] : memref<8x256xf32, #tpu.memory_space<vmem>>, vector<8x256xf32>
    tpu.vector_store %arg14[%c0_6, %c0_7], %7 {strides = array<i32>} : memref<8x256xf32, #tpu.memory_space<vmem>>, vector<8x256xf32>,
    %c0_8 = arith.constant 0 : index
    %c0_9 = arith.constant 0 : index
    %9 = vector.load %arg3[%c0_8, %c0_9] : memref<256x128xbf16, #tpu.memory_space<vmem>>, vector<256x128xbf16>
    %cst_10 = arith.constant dense<0.000000e+00> : vector<8x128xf32>
    %10 = tpu.matmul %0, %9, %cst_10 {dimension_numbers = #tpu.dot_dimension_numbers<[1], [0], [0], [1], [0, 0, 1, 1], [], []>} : vector<8x256xbf16>, vector<256x128xbf16>, vector<8x128xf32> -> vector<8x128xf32>
    %c0_11 = arith.constant 0 : index
    %c0_12 = arith.constant 0 : index
    %11 = vector.load %arg9[%c0_11, %c0_12] : memref<1x128xf32, #tpu.memory_space<vmem>>, vector<1x128xf32>
    %12 = vector.broadcast %11 : vector<1x128xf32> to vector<8x128xf32>
    %13 = arith.addf %10, %12 : vector<8x128xf32>
    %cst_13 = arith.constant 0.000000e+00 : f32
    %14 = vector.broadcast %cst_13 : f32 to vector<8x128xf32>
    %15 = arith.maximumf %13, %14 : vector<8x128xf32>
    %c0_14 = arith.constant 0 : index
    %c0_15 = arith.constant 0 : index
    %16 = vector.load %arg15[%c0_14, %c0_15] : memref<8x128xf32, #tpu.memory_space<vmem>>, vector<8x128xf32>
    tpu.vector_store %arg15[%c0_14, %c0_15], %15 {strides = array<i32>} : memref<8x128xf32, #tpu.memory_space<vmem>>, vector<8x128xf32>,
    %c0_16 = arith.constant 0 : index
    %c0_17 = arith.constant 0 : index
    %17 = vector.load %arg4[%c0_16, %c0_17] : memref<256x128xbf16, #tpu.memory_space<vmem>>, vector<256x128xbf16>
    %cst_18 = arith.constant dense<0.000000e+00> : vector<8x128xf32>
    %18 = tpu.matmul %0, %17, %cst_18 {dimension_numbers = #tpu.dot_dimension_numbers<[1], [0], [0], [1], [0, 0, 1, 1], [], []>} : vector<8x256xbf16>, vector<256x128xbf16>, vector<8x128xf32> -> vector<8x128xf32>
    %c0_19 = arith.constant 0 : index
    %c0_20 = arith.constant 0 : index
    %19 = vector.load %arg10[%c0_19, %c0_20] : memref<1x128xf32, #tpu.memory_space<vmem>>, vector<1x128xf32>
    %20 = vector.broadcast %19 : vector<1x128xf32> to vector<8x128xf32>
    %21 = arith.addf %18, %20 : vector<8x128xf32>
    %cst_21 = arith.constant 0.000000e+00 : f32
    %22 = vector.broadcast %cst_21 : f32 to vector<8x128xf32>
    %23 = arith.maximumf %21, %22 : vector<8x128xf32>
    %c0_22 = arith.constant 0 : index
    %c0_23 = arith.constant 0 : index
    %24 = vector.load %arg16[%c0_22, %c0_23] : memref<8x128xf32, #tpu.memory_space<vmem>>, vector<8x128xf32>
    tpu.vector_store %arg16[%c0_22, %c0_23], %23 {strides = array<i32>} : memref<8x128xf32, #tpu.memory_space<vmem>>, vector<8x128xf32>,
    %c0_24 = arith.constant 0 : index
    %c0_25 = arith.constant 0 : index
    %25 = vector.load %arg5[%c0_24, %c0_25] : memref<256x64xbf16, #tpu.memory_space<vmem>>, vector<256x64xbf16>
    %cst_26 = arith.constant dense<0.000000e+00> : vector<8x64xf32>
    %26 = tpu.matmul %0, %25, %cst_26 {dimension_numbers = #tpu.dot_dimension_numbers<[1], [0], [0], [1], [0, 0, 1, 1], [], []>} : vector<8x256xbf16>, vector<256x64xbf16>, vector<8x64xf32> -> vector<8x64xf32>
    %c0_27 = arith.constant 0 : index
    %c0_28 = arith.constant 0 : index
    %27 = vector.load %arg11[%c0_27, %c0_28] : memref<1x64xf32, #tpu.memory_space<vmem>>, vector<1x64xf32>
    %28 = vector.broadcast %27 : vector<1x64xf32> to vector<8x64xf32>
    %29 = arith.addf %26, %28 : vector<8x64xf32>
    %cst_29 = arith.constant 0.000000e+00 : f32
    %30 = vector.broadcast %cst_29 : f32 to vector<8x64xf32>
    %31 = arith.maximumf %29, %30 : vector<8x64xf32>
    %c0_30 = arith.constant 0 : index
    %c0_31 = arith.constant 0 : index
    %32 = vector.load %arg17[%c0_30, %c0_31] : memref<8x64xf32, #tpu.memory_space<vmem>>, vector<8x64xf32>
    tpu.vector_store %arg17[%c0_30, %c0_31], %31 {strides = array<i32>} : memref<8x64xf32, #tpu.memory_space<vmem>>, vector<8x64xf32>,
    %c0_32 = arith.constant 0 : index
    %c0_33 = arith.constant 0 : index
    %33 = vector.load %arg6[%c0_32, %c0_33] : memref<256x32xbf16, #tpu.memory_space<vmem>>, vector<256x32xbf16>
    %cst_34 = arith.constant dense<0.000000e+00> : vector<8x32xf32>
    %34 = tpu.matmul %0, %33, %cst_34 {dimension_numbers = #tpu.dot_dimension_numbers<[1], [0], [0], [1], [0, 0, 1, 1], [], []>} : vector<8x256xbf16>, vector<256x32xbf16>, vector<8x32xf32> -> vector<8x32xf32>
    %c0_35 = arith.constant 0 : index
    %c0_36 = arith.constant 0 : index
    %35 = vector.load %arg12[%c0_35, %c0_36] : memref<1x32xf32, #tpu.memory_space<vmem>>, vector<1x32xf32>
    %36 = vector.broadcast %35 : vector<1x32xf32> to vector<8x32xf32>
    %37 = arith.addf %34, %36 : vector<8x32xf32>
    %cst_37 = arith.constant 0.000000e+00 : f32
    %38 = vector.broadcast %cst_37 : f32 to vector<8x32xf32>
    %39 = arith.maximumf %37, %38 : vector<8x32xf32>
    %c0_38 = arith.constant 0 : index
    %c0_39 = arith.constant 0 : index
    %40 = vector.load %arg18[%c0_38, %c0_39] : memref<8x32xf32, #tpu.memory_space<vmem>>, vector<8x32xf32>
    tpu.vector_store %arg18[%c0_38, %c0_39], %39 {strides = array<i32>} : memref<8x32xf32, #tpu.memory_space<vmem>>, vector<8x32xf32>,
    %c0_40 = arith.constant 0 : index
    %c0_41 = arith.constant 0 : index
    %41 = vector.load %arg7[%c0_40, %c0_41] : memref<256x16xbf16, #tpu.memory_space<vmem>>, vector<256x16xbf16>
    %cst_42 = arith.constant dense<0.000000e+00> : vector<8x16xf32>
    %42 = tpu.matmul %0, %41, %cst_42 {dimension_numbers = #tpu.dot_dimension_numbers<[1], [0], [0], [1], [0, 0, 1, 1], [], []>} : vector<8x256xbf16>, vector<256x16xbf16>, vector<8x16xf32> -> vector<8x16xf32>
    %c0_43 = arith.constant 0 : index
    %c0_44 = arith.constant 0 : index
    %43 = vector.load %arg13[%c0_43, %c0_44] : memref<1x16xf32, #tpu.memory_space<vmem>>, vector<1x16xf32>
    %44 = vector.broadcast %43 : vector<1x16xf32> to vector<8x16xf32>
    %45 = arith.addf %42, %44 : vector<8x16xf32>
    %cst_45 = arith.constant 0.000000e+00 : f32
    %46 = vector.broadcast %cst_45 : f32 to vector<8x16xf32>
    %47 = arith.maximumf %45, %46 : vector<8x16xf32>
    %c0_46 = arith.constant 0 : index
    %c0_47 = arith.constant 0 : index
    %48 = vector.load %arg19[%c0_46, %c0_47] : memref<8x16xf32, #tpu.memory_space<vmem>>, vector<8x16xf32>
    tpu.vector_store %arg19[%c0_46, %c0_47], %47 {strides = array<i32>} : memref<8x16xf32, #tpu.memory_space<vmem>>, vector<8x16xf32>,
    return
  }
  func.func @transform_0(%arg0: i32) -> (i32, i32) {
    %c0_i32 = arith.constant 0 : i32
    %c0_i32_0 = arith.constant 0 : i32
    return %arg0, %c0_i32 : i32, i32
  }
  func.func @transform_1(%arg0: i32) -> (i32, i32) {
    %c0_i32 = arith.constant 0 : i32
    %c0_i32_0 = arith.constant 0 : i32
    %c0_i32_1 = arith.constant 0 : i32
    return %c0_i32, %c0_i32_0 : i32, i32
  }
  func.func @transform_2(%arg0: i32) -> (i32, i32) {
    %c0_i32 = arith.constant 0 : i32
    %c0_i32_0 = arith.constant 0 : i32
    %c0_i32_1 = arith.constant 0 : i32
    return %c0_i32, %c0_i32_0 : i32, i32
  }
  func.func @transform_3(%arg0: i32) -> (i32, i32) {
    %c0_i32 = arith.constant 0 : i32
    %c0_i32_0 = arith.constant 0 : i32
    %c0_i32_1 = arith.constant 0 : i32
    return %c0_i32, %c0_i32_0 : i32, i32
  }
  func.func @transform_4(%arg0: i32) -> (i32, i32) {
    %c0_i32 = arith.constant 0 : i32
    %c0_i32_0 = arith.constant 0 : i32
    %c0_i32_1 = arith.constant 0 : i32
    return %c0_i32, %c0_i32_0 : i32, i32
  }
  func.func @transform_5(%arg0: i32) -> (i32, i32) {
    %c0_i32 = arith.constant 0 : i32
    %c0_i32_0 = arith.constant 0 : i32
    %c0_i32_1 = arith.constant 0 : i32
    return %c0_i32, %c0_i32_0 : i32, i32
  }
  func.func @transform_6(%arg0: i32) -> (i32, i32) {
    %c0_i32 = arith.constant 0 : i32
    %c0_i32_0 = arith.constant 0 : i32
    %c0_i32_1 = arith.constant 0 : i32
    return %c0_i32, %c0_i32_0 : i32, i32
  }
  func.func @transform_7(%arg0: i32) -> (i32, i32) {
    %c0_i32 = arith.constant 0 : i32
    %c0_i32_0 = arith.constant 0 : i32
    %c0_i32_1 = arith.constant 0 : i32
    return %c0_i32, %c0_i32_0 : i32, i32
  }
  func.func @transform_8(%arg0: i32) -> (i32, i32) {
    %c0_i32 = arith.constant 0 : i32
    %c0_i32_0 = arith.constant 0 : i32
    %c0_i32_1 = arith.constant 0 : i32
    return %c0_i32, %c0_i32_0 : i32, i32
  }
  func.func @transform_9(%arg0: i32) -> (i32, i32) {
    %c0_i32 = arith.constant 0 : i32
    %c0_i32_0 = arith.constant 0 : i32
    %c0_i32_1 = arith.constant 0 : i32
    return %c0_i32, %c0_i32_0 : i32, i32
  }
  func.func @transform_10(%arg0: i32) -> (i32, i32) {
    %c0_i32 = arith.constant 0 : i32
    %c0_i32_0 = arith.constant 0 : i32
    %c0_i32_1 = arith.constant 0 : i32
    return %c0_i32, %c0_i32_0 : i32, i32
  }
  func.func @transform_11(%arg0: i32) -> (i32, i32) {
    %c0_i32 = arith.constant 0 : i32
    %c0_i32_0 = arith.constant 0 : i32
    %c0_i32_1 = arith.constant 0 : i32
    return %c0_i32, %c0_i32_0 : i32, i32
  }
  func.func @transform_12(%arg0: i32) -> (i32, i32) {
    %c0_i32 = arith.constant 0 : i32
    %c0_i32_0 = arith.constant 0 : i32
    %c0_i32_1 = arith.constant 0 : i32
    return %c0_i32, %c0_i32_0 : i32, i32
  }
  func.func @transform_13(%arg0: i32) -> (i32, i32) {
    %c0_i32 = arith.constant 0 : i32
    %c0_i32_0 = arith.constant 0 : i32
    return %arg0, %c0_i32 : i32, i32
  }
  func.func @transform_14(%arg0: i32) -> (i32, i32) {
    %c0_i32 = arith.constant 0 : i32
    %c0_i32_0 = arith.constant 0 : i32
    return %arg0, %c0_i32 : i32, i32
  }
  func.func @transform_15(%arg0: i32) -> (i32, i32) {
    %c0_i32 = arith.constant 0 : i32
    %c0_i32_0 = arith.constant 0 : i32
    return %arg0, %c0_i32 : i32, i32
  }
  func.func @transform_16(%arg0: i32) -> (i32, i32) {
    %c0_i32 = arith.constant 0 : i32
    %c0_i32_0 = arith.constant 0 : i32
    return %arg0, %c0_i32 : i32, i32
  }
  func.func @transform_17(%arg0: i32) -> (i32, i32) {
    %c0_i32 = arith.constant 0 : i32
    %c0_i32_0 = arith.constant 0 : i32
    return %arg0, %c0_i32 : i32, i32
  }
  func.func @transform_18(%arg0: i32) -> (i32, i32) {
    %c0_i32 = arith.constant 0 : i32
    %c0_i32_0 = arith.constant 0 : i32
    return %arg0, %c0_i32 : i32, i32
  }
}

</mosaic_0001>

<llo_original>
// kernel: tpu_custom_call.1
$region0: #{tpu_custom_call.1}
  #allocation0 [shape = 'u32[]', space=smem, size = 0x4, offset = 0x4, fixed_abs, tag = 'smem constant byte address 0x4 - core index']
  #allocation1 [shape = 'u32[144,128]{1,0:T(1,128)}', space=vmem, size = 0x12000, scoped, tag = 'internal scratch']
  %s0 = inlined_call_operand.vmem [shape: bf16[8,256], index: 0, kind: input, shape index: {}]
  %s1 = inlined_call_operand.vmem [shape: bf16[256,256], index: 1, kind: input, shape index: {}]
  %s2 = inlined_call_operand.vmem [shape: bf16[256,128], index: 2, kind: input, shape index: {}]
  %s3 = inlined_call_operand.hbm [shape: bf16[256,128], index: 3, kind: input, shape index: {}]
  %s4 = inlined_call_operand.vmem [shape: bf16[256,64], index: 4, kind: input, shape index: {}]
  %s5 = inlined_call_operand.vmem [shape: bf16[256,32], index: 5, kind: input, shape index: {}]
  %s6 = inlined_call_operand.vmem [shape: bf16[256,16], index: 6, kind: input, shape index: {}]
  %s7 = inlined_call_operand.vmem [shape: f32[1,256], index: 7, kind: input, shape index: {}]
  %s8 = inlined_call_operand.vmem [shape: f32[1,128], index: 8, kind: input, shape index: {}]
  %s9 = inlined_call_operand.vmem [shape: f32[1,128], index: 9, kind: input, shape index: {}]
  %s10 = inlined_call_operand.vmem [shape: f32[1,64], index: 10, kind: input, shape index: {}]
  %s11 = inlined_call_operand.vmem [shape: f32[1,32], index: 11, kind: input, shape index: {}]
  %s12 = inlined_call_operand.vmem [shape: f32[1,16], index: 12, kind: input, shape index: {}]
  %s13 = inlined_call_operand.hbm [shape: f32[8,256], index: 13, kind: output, shape index: {0}]
  %s14 = inlined_call_operand.hbm [shape: f32[8,128], index: 14, kind: output, shape index: {1}]
  %s15 = inlined_call_operand.hbm [shape: f32[8,128], index: 15, kind: output, shape index: {2}]
  %s16 = inlined_call_operand.hbm [shape: f32[8,64], index: 16, kind: output, shape index: {3}]
  %s17 = inlined_call_operand.hbm [shape: f32[8,32], index: 17, kind: output, shape index: {4}]
  %s18 = inlined_call_operand.hbm [shape: f32[8,16], index: 18, kind: output, shape index: {5}]
  %19 = xla_tuple %s13, %s14, %s15, %s16, %s17, %s18
  %s20 = sld [smem:[#allocation0]]
  $region106: #{tpu_custom_call.1} parent=0
    _
  %s22 = ssub.s32 1, %s20
  %s23 = scalar_select 0, %s22, %s20
  $region1: #{tpu_custom_call.1} parent=0
    #allocation2 [shape = 'u8[65536]{0}', space=vmem, size = 0x10000, scoped, tag = 'input window, operand 3, single buffered']
    #allocation3 [shape = 's32[1]{0}', space=sflag, size = 0x4, scoped, tag = 'scoped memory for tpu_custom_call.1']
    #allocation4 [shape = 's32[1]{0}', space=sflag, size = 0x4, scoped, tag = 'scoped memory for tpu_custom_call.1']
    #allocation5 [shape = 'u8[8192]{0}', space=vmem, size = 0x2000, scoped, tag = 'output window, operand 0, single buffered']
    #allocation6 [shape = 'u8[4096]{0}', space=vmem, size = 0x1000, scoped, tag = 'output window, operand 1, single buffered']
    #allocation7 [shape = 's32[1]{0}', space=sflag, size = 0x4, scoped, tag = 'scoped memory for tpu_custom_call.1']
    #allocation8 [shape = 'u8[4096]{0}', space=vmem, size = 0x1000, scoped, tag = 'output window, operand 2, single buffered']
    #allocation9 [shape = 'u8[4096]{0}', space=vmem, size = 0x1000, scoped, tag = 'output window, operand 3, single buffered']
    #allocation10 [shape = 's32[1]{0}', space=sflag, size = 0x4, scoped, tag = 'scoped memory for tpu_custom_call.1']
    #allocation11 [shape = 'u8[4096]{0}', space=vmem, size = 0x1000, scoped, tag = 'output window, operand 4, single buffered']
    #allocation12 [shape = 'u8[4096]{0}', space=vmem, size = 0x1000, scoped, tag = 'output window, operand 5, single buffered']
    #allocation13 [shape = 's32[1]{0}', space=sflag, size = 0x4, scoped, tag = 'scoped memory for tpu_custom_call.1']
    %24 = vsyncpa [#allocation3], 0
    %25 = vsyncpa [#allocation4], 0
    %26 = vsyncpa [#allocation7], 0
    %27 = vsyncpa [#allocation10], 0
    %28 = vsyncpa [#allocation13], 0
    // Predicated region
    $region2: #{tpu_custom_call.1} parent=1 // pred_check
      _
    $region3: #{tpu_custom_call.1} parent=1 // pred_check_branch
      %30 = sbr.rel (0) target = $region5
    $region4: #{tpu_custom_call.1} parent=1 // pred_region
      _
    $region5: #{tpu_custom_call.1} parent=1 // pred_fallthru
      _
    // Predicated region
    $region6: #{tpu_custom_call.1} parent=1 // pred_check
      _
    $region7: #{tpu_custom_call.1} parent=1 // pred_check_branch
      %32 = sbr.rel (0) target = $region9
    $region8: #{tpu_custom_call.1} parent=1 // pred_region
      _
    $region9: #{tpu_custom_call.1} parent=1 // pred_fallthru
      _
    // Predicated region
    $region10: #{tpu_custom_call.1} parent=1 // pred_check
      _
    $region11: #{tpu_custom_call.1} parent=1 // pred_check_branch
      %34 = sbr.rel (0) target = $region13
    $region12: #{tpu_custom_call.1} parent=1 // pred_region
      _
    $region13: #{tpu_custom_call.1} parent=1 // pred_fallthru
      _
    // Predicated region
    $region14: #{tpu_custom_call.1} parent=1 // pred_check
      _
    $region15: #{tpu_custom_call.1} parent=1 // pred_check_branch
      %36 = sbr.rel (0) target = $region17
    $region16: #{tpu_custom_call.1} parent=1 // pred_region
      %s38 = ssub.s32 2048, 2048
      %39 = vsyncadd [#allocation3], %s38
      %s40 = sshll.u32 [#allocation2], 4
      %s41 = int_to_ptr.vmem [resolvable:$true] %s40
      %46 = dma.hbm_to_vmem [thread:$0]  %s3, 2048, %s41, [#allocation3], 64, 64, 4
    $region17: #{tpu_custom_call.1} parent=1 // pred_fallthru
      _
    // Predicated region
    $region18: #{tpu_custom_call.1} parent=1 // pred_check
      _
    $region19: #{tpu_custom_call.1} parent=1 // pred_check_branch
      %48 = sbr.rel (0) target = $region21
    $region20: #{tpu_custom_call.1} parent=1 // pred_region
      _
    $region21: #{tpu_custom_call.1} parent=1 // pred_fallthru
      _
    // Predicated region
    $region22: #{tpu_custom_call.1} parent=1 // pred_check
      _
    $region23: #{tpu_custom_call.1} parent=1 // pred_check_branch
      %50 = sbr.rel (0) target = $region25
    $region24: #{tpu_custom_call.1} parent=1 // pred_region
      _
    $region25: #{tpu_custom_call.1} parent=1 // pred_fallthru
      _
    // Predicated region
    $region26: #{tpu_custom_call.1} parent=1 // pred_check
      _
    $region27: #{tpu_custom_call.1} parent=1 // pred_check_branch
      %52 = sbr.rel (0) target = $region29
    $region28: #{tpu_custom_call.1} parent=1 // pred_region
      _
    $region29: #{tpu_custom_call.1} parent=1 // pred_fallthru
      _
    // Predicated region
    $region30: #{tpu_custom_call.1} parent=1 // pred_check
      _
    $region31: #{tpu_custom_call.1} parent=1 // pred_check_branch
      %54 = sbr.rel (0) target = $region33
    $region32: #{tpu_custom_call.1} parent=1 // pred_region
      _
    $region33: #{tpu_custom_call.1} parent=1 // pred_fallthru
      _
    // Predicated region
    $region34: #{tpu_custom_call.1} parent=1 // pred_check
      _
    $region35: #{tpu_custom_call.1} parent=1 // pred_check_branch
      %56 = sbr.rel (0) target = $region37
    $region36: #{tpu_custom_call.1} parent=1 // pred_region
      _
    $region37: #{tpu_custom_call.1} parent=1 // pred_fallthru
      _
    // Predicated region
    $region38: #{tpu_custom_call.1} parent=1 // pred_check
      _
    $region39: #{tpu_custom_call.1} parent=1 // pred_check_branch
      %58 = sbr.rel (0) target = $region41
    $region40: #{tpu_custom_call.1} parent=1 // pred_region
      _
    $region41: #{tpu_custom_call.1} parent=1 // pred_fallthru
      _
    // Predicated region
    $region42: #{tpu_custom_call.1} parent=1 // pred_check
      _
    $region43: #{tpu_custom_call.1} parent=1 // pred_check_branch
      %60 = sbr.rel (0) target = $region45
    $region44: #{tpu_custom_call.1} parent=1 // pred_region
      _
    $region45: #{tpu_custom_call.1} parent=1 // pred_fallthru
      _
    // Predicated region
    $region46: #{tpu_custom_call.1} parent=1 // pred_check
      _
    $region47: #{tpu_custom_call.1} parent=1 // pred_check_branch
      %62 = sbr.rel (0) target = $region49
    $region48: #{tpu_custom_call.1} parent=1 // pred_region
      _
    $region49: #{tpu_custom_call.1} parent=1 // pred_fallthru
      _
    // Predicated region
    $region50: #{tpu_custom_call.1} parent=1 // pred_check
      _
    $region51: #{tpu_custom_call.1} parent=1 // pred_check_branch
      %64 = sbr.rel (0) target = $region53
    $region52: #{tpu_custom_call.1} parent=1 // pred_region
      _
    $region53: #{tpu_custom_call.1} parent=1 // pred_fallthru
      _
    // Predicated region
    $region54: #{tpu_custom_call.1} parent=1 // pred_check
      _
    $region55: #{tpu_custom_call.1} parent=1 // pred_check_branch
      %66 = sbr.rel (0) target = $region57
    $region56: #{tpu_custom_call.1} parent=1 // pred_region
      %67 = dma.done [#allocation3], 2048
    $region57: #{tpu_custom_call.1} parent=1 // pred_fallthru
      _
    %v69 = vld [vmem:[%s0] sm:$0xff]
    %v70 = vld [vmem:[%s1] sm:$0xff]
    %v71 = vld [vmem:[%s1 + $0x8] sm:$0xff]
    %v72 = vld [vmem:[%s1 + $0x10] sm:$0xff]
    %v73 = vld [vmem:[%s1 + $0x18] sm:$0xff]
    %v74 = vld [vmem:[%s1 + $0x20] sm:$0xff]
    %v75 = vld [vmem:[%s1 + $0x28] sm:$0xff]
    %v76 = vld [vmem:[%s1 + $0x30] sm:$0xff]
    %v77 = vld [vmem:[%s1 + $0x38] sm:$0xff]
    %v78 = vld [vmem:[%s1 + $0x40] sm:$0xff]
    %v79 = vld [vmem:[%s1 + $0x48] sm:$0xff]
    %v80 = vld [vmem:[%s1 + $0x50] sm:$0xff]
    %v81 = vld [vmem:[%s1 + $0x58] sm:$0xff]
    %v82 = vld [vmem:[%s1 + $0x60] sm:$0xff]
    %v83 = vld [vmem:[%s1 + $0x68] sm:$0xff]
    %v84 = vld [vmem:[%s1 + $0x70] sm:$0xff]
    %v85 = vld [vmem:[%s1 + $0x78] sm:$0xff]
    %v86 = vld [vmem:[%s1 + $0x80] sm:$0xff]
    %v87 = vld [vmem:[%s1 + $0x88] sm:$0xff]
    %v88 = vld [vmem:[%s1 + $0x90] sm:$0xff]
    %v89 = vld [vmem:[%s1 + $0x98] sm:$0xff]
    %v90 = vld [vmem:[%s1 + $0xa0] sm:$0xff]
    %v91 = vld [vmem:[%s1 + $0xa8] sm:$0xff]
    %v92 = vld [vmem:[%s1 + $0xb0] sm:$0xff]
    %v93 = vld [vmem:[%s1 + $0xb8] sm:$0xff]
    %v94 = vld [vmem:[%s1 + $0xc0] sm:$0xff]
    %v95 = vld [vmem:[%s1 + $0xc8] sm:$0xff]
    %v96 = vld [vmem:[%s1 + $0xd0] sm:$0xff]
    %v97 = vld [vmem:[%s1 + $0xd8] sm:$0xff]
    %v98 = vld [vmem:[%s1 + $0xe0] sm:$0xff]
    %v99 = vld [vmem:[%s1 + $0xe8] sm:$0xff]
    %v100 = vld [vmem:[%s1 + $0xf0] sm:$0xff]
    %v101 = vld [vmem:[%s1 + $0xf8] sm:$0xff]
    %v102 = vld [vmem:[%s7] sm:$0x3]
    %v104 = vlaneseq
    %v105 = vshrl.u32 %v104, 7
    %v106 = vsub.s32 0, %v105
    %v107 = vrot.slane %v102, %v106
    %v108 = vlaneseq
    %v109 = vshrl.u32 %v108, 7
    %v110 = vsub.s32 1, %v109
    %v111 = vrot.slane %v102, %v110
    %v115 = vunpack.c.l.b16 %v69
    %v116 = vunpack.c.h.b16 %v69
    %v117 = vpack.c.b16 %v115, %v115
    %v118 = vpack.c.b16 %v116, %v116
    %v153 = vunpack.c.l.b16 %v70
    %v154 = vunpack.c.h.b16 %v70
    %v155 = vunpack.c.l.b16 %v71
    %v156 = vunpack.c.h.b16 %v71
    %v157 = vunpack.c.l.b16 %v72
    %v158 = vunpack.c.h.b16 %v72
    %v159 = vunpack.c.l.b16 %v73
    %v160 = vunpack.c.h.b16 %v73
    %v161 = vunpack.c.l.b16 %v74
    %v162 = vunpack.c.h.b16 %v74
    %v163 = vunpack.c.l.b16 %v75
    %v164 = vunpack.c.h.b16 %v75
    %v165 = vunpack.c.l.b16 %v76
    %v166 = vunpack.c.h.b16 %v76
    %v167 = vunpack.c.l.b16 %v77
    %v168 = vunpack.c.h.b16 %v77
    %v169 = vunpack.c.l.b16 %v78
    %v170 = vunpack.c.h.b16 %v78
    %v171 = vunpack.c.l.b16 %v79
    %v172 = vunpack.c.h.b16 %v79
    %v173 = vunpack.c.l.b16 %v80
    %v174 = vunpack.c.h.b16 %v80
    %v175 = vunpack.c.l.b16 %v81
    %v176 = vunpack.c.h.b16 %v81
    %v177 = vunpack.c.l.b16 %v82
    %v178 = vunpack.c.h.b16 %v82
    %v179 = vunpack.c.l.b16 %v83
    %v180 = vunpack.c.h.b16 %v83
    %v181 = vunpack.c.l.b16 %v84
    %v182 = vunpack.c.h.b16 %v84
    %v183 = vunpack.c.l.b16 %v85
    %v184 = vunpack.c.h.b16 %v85
    %v185 = vunpack.c.l.b16 %v86
    %v186 = vunpack.c.h.b16 %v86
    %v187 = vunpack.c.l.b16 %v87
    %v188 = vunpack.c.h.b16 %v87
    %v189 = vunpack.c.l.b16 %v88
    %v190 = vunpack.c.h.b16 %v88
    %v191 = vunpack.c.l.b16 %v89
    %v192 = vunpack.c.h.b16 %v89
    %v193 = vunpack.c.l.b16 %v90
    %v194 = vunpack.c.h.b16 %v90
    %v195 = vunpack.c.l.b16 %v91
    %v196 = vunpack.c.h.b16 %v91
    %v197 = vunpack.c.l.b16 %v92
    %v198 = vunpack.c.h.b16 %v92
    %v199 = vunpack.c.l.b16 %v93
    %v200 = vunpack.c.h.b16 %v93
    %v201 = vunpack.c.l.b16 %v94
    %v202 = vunpack.c.h.b16 %v94
    %v203 = vunpack.c.l.b16 %v95
    %v204 = vunpack.c.h.b16 %v95
    %v205 = vunpack.c.l.b16 %v96
    %v206 = vunpack.c.h.b16 %v96
    %v207 = vunpack.c.l.b16 %v97
    %v208 = vunpack.c.h.b16 %v97
    %v209 = vunpack.c.l.b16 %v98
    %v210 = vunpack.c.h.b16 %v98
    %v211 = vunpack.c.l.b16 %v99
    %v212 = vunpack.c.h.b16 %v99
    %v213 = vunpack.c.l.b16 %v100
    %v214 = vunpack.c.h.b16 %v100
    %v215 = vunpack.c.l.b16 %v101
    %v216 = vunpack.c.h.b16 %v101
    %v217 = vpack.c.b16 %v155, %v153
    %v218 = vpack.c.b16 %v156, %v154
    %v219 = vpack.c.b16 %v159, %v157
    %v220 = vpack.c.b16 %v160, %v158
    %v221 = vpack.c.b16 %v163, %v161
    %v222 = vpack.c.b16 %v164, %v162
    %v223 = vpack.c.b16 %v167, %v165
    %v224 = vpack.c.b16 %v168, %v166
    %v225 = vpack.c.b16 %v171, %v169
    %v226 = vpack.c.b16 %v172, %v170
    %v227 = vpack.c.b16 %v175, %v173
    %v228 = vpack.c.b16 %v176, %v174
    %v229 = vpack.c.b16 %v179, %v177
    %v230 = vpack.c.b16 %v180, %v178
    %v231 = vpack.c.b16 %v183, %v181
    %v232 = vpack.c.b16 %v184, %v182
    %v233 = vpack.c.b16 %v187, %v185
    %v234 = vpack.c.b16 %v188, %v186
    %v235 = vpack.c.b16 %v191, %v189
    %v236 = vpack.c.b16 %v192, %v190
    %v237 = vpack.c.b16 %v195, %v193
    %v238 = vpack.c.b16 %v196, %v194
    %v239 = vpack.c.b16 %v199, %v197
    %v240 = vpack.c.b16 %v200, %v198
    %v241 = vpack.c.b16 %v203, %v201
    %v242 = vpack.c.b16 %v204, %v202
    %v243 = vpack.c.b16 %v207, %v205
    %v244 = vpack.c.b16 %v208, %v206
    %v245 = vpack.c.b16 %v211, %v209
    %v246 = vpack.c.b16 %v212, %v210
    %v247 = vpack.c.b16 %v215, %v213
    %v248 = vpack.c.b16 %v216, %v214
    %281 = vmatprep.subr.bf16.mxu0 %v218
    %282 = vmatpush1.bf16.msra.mxu0 %v217
    %283 = vmatprep.subr.bf16.mxu0 %v220
    %284 = vmatpush1.bf16.msra.mxu0 %v219
    %285 = vmatprep.subr.bf16.mxu0 %v222
    %286 = vmatpush1.bf16.msra.mxu0 %v221
    %287 = vmatprep.subr.bf16.mxu0 %v224
    %288 = vmatpush1.bf16.msra.mxu0 %v223
    %289 = vmatprep.subr.bf16.mxu0 %v226
    %290 = vmatpush1.bf16.msra.mxu0 %v225
    %291 = vmatprep.subr.bf16.mxu0 %v228
    %292 = vmatpush1.bf16.msra.mxu0 %v227
    %293 = vmatprep.subr.bf16.mxu0 %v230
    %294 = vmatpush1.bf16.msra.mxu0 %v229
    %295 = vmatprep.subr.bf16.mxu0 %v232
    %296 = vmatpush1.bf16.msra.mxu0 %v231
    %297 = vmatprep.subr.bf16.mxu0 %v234
    %298 = vmatpush1.bf16.msra.mxu0 %v233
    %299 = vmatprep.subr.bf16.mxu0 %v236
    %300 = vmatpush1.bf16.msra.mxu0 %v235
    %301 = vmatprep.subr.bf16.mxu0 %v238
    %302 = vmatpush1.bf16.msra.mxu0 %v237
    %303 = vmatprep.subr.bf16.mxu0 %v240
    %304 = vmatpush1.bf16.msra.mxu0 %v239
    %305 = vmatprep.subr.bf16.mxu0 %v242
    %306 = vmatpush1.bf16.msra.mxu0 %v241
    %307 = vmatprep.subr.bf16.mxu0 %v244
    %308 = vmatpush1.bf16.msra.mxu0 %v243
    %309 = vmatprep.subr.bf16.mxu0 %v246
    %310 = vmatpush1.bf16.msra.mxu0 %v245
    %311 = vmatprep.subr.bf16.mxu0 %v248
    %312 = vmatpush1.bf16.msra.mxu0 %v247
    %313 = vmatprep.mubr.bf16.mxu0 %v118
    %314 = vmatmul.mubr.bf16.gmra.mrb[0].mxu0 %v117
    %v315 = vpop.f32.mrb[0].mxu0
    %v316 = vadd.f32 %v107, %v315
    %v317 = vpop.f32.mrb[0].mxu0
    %v318 = vadd.f32 %v111, %v317
    %v319 = vpop.f32.mrb[0].mxu0
    %v320 = vpop.f32.mrb[0].mxu0
    %321 = vdwg.mxu0
    %v322 = vmax.f32 %v316, 0.0
    %v323 = vmax.f32 %v318, 0.0
    %324 = vst [vmem:[#allocation5] sm:$0xff] %v322
    %325 = vst [vmem:[#allocation5 + $0x8] sm:$0xff] %v323
    %v326 = vld [vmem:[%s2] sm:$0xf]
    %v327 = vld [vmem:[%s2 + $0x4] sm:$0xf]
    %v328 = vld [vmem:[%s2 + $0x8] sm:$0xf]
    %v329 = vld [vmem:[%s2 + $0xc] sm:$0xf]
    %v330 = vld [vmem:[%s2 + $0x10] sm:$0xf]
    %v331 = vld [vmem:[%s2 + $0x14] sm:$0xf]
    %v332 = vld [vmem:[%s2 + $0x18] sm:$0xf]
    %v333 = vld [vmem:[%s2 + $0x1c] sm:$0xf]
    %v334 = vld [vmem:[%s2 + $0x20] sm:$0xf]
    %v335 = vld [vmem:[%s2 + $0x24] sm:$0xf]
    %v336 = vld [vmem:[%s2 + $0x28] sm:$0xf]
    %v337 = vld [vmem:[%s2 + $0x2c] sm:$0xf]
    %v338 = vld [vmem:[%s2 + $0x30] sm:$0xf]
    %v339 = vld [vmem:[%s2 + $0x34] sm:$0xf]
    %v340 = vld [vmem:[%s2 + $0x38] sm:$0xf]
    %v341 = vld [vmem:[%s2 + $0x3c] sm:$0xf]
    %v342 = vld [vmem:[%s2 + $0x40] sm:$0xf]
    %v343 = vld [vmem:[%s2 + $0x44] sm:$0xf]
    %v344 = vld [vmem:[%s2 + $0x48] sm:$0xf]
    %v345 = vld [vmem:[%s2 + $0x4c] sm:$0xf]
    %v346 = vld [vmem:[%s2 + $0x50] sm:$0xf]
    %v347 = vld [vmem:[%s2 + $0x54] sm:$0xf]
    %v348 = vld [vmem:[%s2 + $0x58] sm:$0xf]
    %v349 = vld [vmem:[%s2 + $0x5c] sm:$0xf]
    %v350 = vld [vmem:[%s2 + $0x60] sm:$0xf]
    %v351 = vld [vmem:[%s2 + $0x64] sm:$0xf]
    %v352 = vld [vmem:[%s2 + $0x68] sm:$0xf]
    %v353 = vld [vmem:[%s2 + $0x6c] sm:$0xf]
    %v354 = vld [vmem:[%s2 + $0x70] sm:$0xf]
    %v355 = vld [vmem:[%s2 + $0x74] sm:$0xf]
    %v356 = vld [vmem:[%s2 + $0x78] sm:$0xf]
    %v357 = vld [vmem:[%s2 + $0x7c] sm:$0xf]
    %v358 = vld [vmem:[%s8] sm:$0x1]
    %v360 = vlaneseq
    %v361 = vshrl.u32 %v360, 7
    %v362 = vsub.s32 0, %v361
    %v363 = vrot.slane %v358, %v362
    %v397 = vunpack.c.l.b16 %v326
    %v398 = vunpack.c.l.b16 %v327
    %v399 = vunpack.c.l.b16 %v328
    %v400 = vunpack.c.l.b16 %v329
    %v401 = vunpack.c.l.b16 %v330
    %v402 = vunpack.c.l.b16 %v331
    %v403 = vunpack.c.l.b16 %v332
    %v404 = vunpack.c.l.b16 %v333
    %v405 = vunpack.c.l.b16 %v334
    %v406 = vunpack.c.l.b16 %v335
    %v407 = vunpack.c.l.b16 %v336
    %v408 = vunpack.c.l.b16 %v337
    %v409 = vunpack.c.l.b16 %v338
    %v410 = vunpack.c.l.b16 %v339
    %v411 = vunpack.c.l.b16 %v340
    %v412 = vunpack.c.l.b16 %v341
    %v413 = vunpack.c.l.b16 %v342
    %v414 = vunpack.c.l.b16 %v343
    %v415 = vunpack.c.l.b16 %v344
    %v416 = vunpack.c.l.b16 %v345
    %v417 = vunpack.c.l.b16 %v346
    %v418 = vunpack.c.l.b16 %v347
    %v419 = vunpack.c.l.b16 %v348
    %v420 = vunpack.c.l.b16 %v349
    %v421 = vunpack.c.l.b16 %v350
    %v422 = vunpack.c.l.b16 %v351
    %v423 = vunpack.c.l.b16 %v352
    %v424 = vunpack.c.l.b16 %v353
    %v425 = vunpack.c.l.b16 %v354
    %v426 = vunpack.c.l.b16 %v355
    %v427 = vunpack.c.l.b16 %v356
    %v428 = vunpack.c.l.b16 %v357
    %v429 = vpack.c.b16 %v398, %v397
    %v430 = vpack.c.b16 %v400, %v399
    %v431 = vpack.c.b16 %v402, %v401
    %v432 = vpack.c.b16 %v404, %v403
    %v433 = vpack.c.b16 %v406, %v405
    %v434 = vpack.c.b16 %v408, %v407
    %v435 = vpack.c.b16 %v410, %v409
    %v436 = vpack.c.b16 %v412, %v411
    %v437 = vpack.c.b16 %v414, %v413
    %v438 = vpack.c.b16 %v416, %v415
    %v439 = vpack.c.b16 %v418, %v417
    %v440 = vpack.c.b16 %v420, %v419
    %v441 = vpack.c.b16 %v422, %v421
    %v442 = vpack.c.b16 %v424, %v423
    %v443 = vpack.c.b16 %v426, %v425
    %v444 = vpack.c.b16 %v428, %v427
    %461 = vmatprep.subr.bf16.mxu0 0
    %462 = vmatpush1.bf16.msra.mxu0 %v429
    %463 = vmatprep.subr.bf16.mxu0 0
    %464 = vmatpush1.bf16.msra.mxu0 %v430
    %465 = vmatprep.subr.bf16.mxu0 0
    %466 = vmatpush1.bf16.msra.mxu0 %v431
    %467 = vmatprep.subr.bf16.mxu0 0
    %468 = vmatpush1.bf16.msra.mxu0 %v432
    %469 = vmatprep.subr.bf16.mxu0 0
    %470 = vmatpush1.bf16.msra.mxu0 %v433
    %471 = vmatprep.subr.bf16.mxu0 0
    %472 = vmatpush1.bf16.msra.mxu0 %v434
    %473 = vmatprep.subr.bf16.mxu0 0
    %474 = vmatpush1.bf16.msra.mxu0 %v435
    %475 = vmatprep.subr.bf16.mxu0 0
    %476 = vmatpush1.bf16.msra.mxu0 %v436
    %477 = vmatprep.subr.bf16.mxu0 0
    %478 = vmatpush1.bf16.msra.mxu0 %v437
    %479 = vmatprep.subr.bf16.mxu0 0
    %480 = vmatpush1.bf16.msra.mxu0 %v438
    %481 = vmatprep.subr.bf16.mxu0 0
    %482 = vmatpush1.bf16.msra.mxu0 %v439
    %483 = vmatprep.subr.bf16.mxu0 0
    %484 = vmatpush1.bf16.msra.mxu0 %v440
    %485 = vmatprep.subr.bf16.mxu0 0
    %486 = vmatpush1.bf16.msra.mxu0 %v441
    %487 = vmatprep.subr.bf16.mxu0 0
    %488 = vmatpush1.bf16.msra.mxu0 %v442
    %489 = vmatprep.subr.bf16.mxu0 0
    %490 = vmatpush1.bf16.msra.mxu0 %v443
    %491 = vmatprep.subr.bf16.mxu0 0
    %492 = vmatpush1.bf16.msra.mxu0 %v444
    %493 = vmatprep.mubr.bf16.mxu0 %v118
    %494 = vmatmul.mubr.bf16.gmra.mrb[0].mxu0 %v117
    %v495 = vpop.f32.mrb[0].mxu0
    %v496 = vadd.f32 %v363, %v495
    %v497 = vpop.f32.mrb[0].mxu0
    %v498 = vpop.f32.mrb[0].mxu0
    %v499 = vpop.f32.mrb[0].mxu0
    %500 = vdwg.mxu0
    %v501 = vmax.f32 %v496, 0.0
    %502 = vst [vmem:[#allocation6] sm:$0xff] %v501
    %v503 = vld [vmem:[#allocation2] sm:$0xf]
    %v504 = vld [vmem:[#allocation2 + $0x4] sm:$0xf]
    %v505 = vld [vmem:[#allocation2 + $0x8] sm:$0xf]
    %v506 = vld [vmem:[#allocation2 + $0xc] sm:$0xf]
    %v507 = vld [vmem:[#allocation2 + $0x10] sm:$0xf]
    %v508 = vld [vmem:[#allocation2 + $0x14] sm:$0xf]
    %v509 = vld [vmem:[#allocation2 + $0x18] sm:$0xf]
    %v510 = vld [vmem:[#allocation2 + $0x1c] sm:$0xf]
    %v511 = vld [vmem:[#allocation2 + $0x20] sm:$0xf]
    %v512 = vld [vmem:[#allocation2 + $0x24] sm:$0xf]
    %v513 = vld [vmem:[#allocation2 + $0x28] sm:$0xf]
    %v514 = vld [vmem:[#allocation2 + $0x2c] sm:$0xf]
    %v515 = vld [vmem:[#allocation2 + $0x30] sm:$0xf]
    %v516 = vld [vmem:[#allocation2 + $0x34] sm:$0xf]
    %v517 = vld [vmem:[#allocation2 + $0x38] sm:$0xf]
    %v518 = vld [vmem:[#allocation2 + $0x3c] sm:$0xf]
    %v519 = vld [vmem:[#allocation2 + $0x40] sm:$0xf]
    %v520 = vld [vmem:[#allocation2 + $0x44] sm:$0xf]
    %v521 = vld [vmem:[#allocation2 + $0x48] sm:$0xf]
    %v522 = vld [vmem:[#allocation2 + $0x4c] sm:$0xf]
    %v523 = vld [vmem:[#allocation2 + $0x50] sm:$0xf]
    %v524 = vld [vmem:[#allocation2 + $0x54] sm:$0xf]
    %v525 = vld [vmem:[#allocation2 + $0x58] sm:$0xf]
    %v526 = vld [vmem:[#allocation2 + $0x5c] sm:$0xf]
    %v527 = vld [vmem:[#allocation2 + $0x60] sm:$0xf]
    %v528 = vld [vmem:[#allocation2 + $0x64] sm:$0xf]
    %v529 = vld [vmem:[#allocation2 + $0x68] sm:$0xf]
    %v530 = vld [vmem:[#allocation2 + $0x6c] sm:$0xf]
    %v531 = vld [vmem:[#allocation2 + $0x70] sm:$0xf]
    %v532 = vld [vmem:[#allocation2 + $0x74] sm:$0xf]
    %v533 = vld [vmem:[#allocation2 + $0x78] sm:$0xf]
    %v534 = vld [vmem:[#allocation2 + $0x7c] sm:$0xf]
    %v535 = vld [vmem:[%s9] sm:$0x1]
    %v537 = vlaneseq
    %v538 = vshrl.u32 %v537, 7
    %v539 = vsub.s32 0, %v538
    %v540 = vrot.slane %v535, %v539
    %v574 = vunpack.c.l.b16 %v503
    %v575 = vunpack.c.l.b16 %v504
    %v576 = vunpack.c.l.b16 %v505
    %v577 = vunpack.c.l.b16 %v506
    %v578 = vunpack.c.l.b16 %v507
    %v579 = vunpack.c.l.b16 %v508
    %v580 = vunpack.c.l.b16 %v509
    %v581 = vunpack.c.l.b16 %v510
    %v582 = vunpack.c.l.b16 %v511
    %v583 = vunpack.c.l.b16 %v512
    %v584 = vunpack.c.l.b16 %v513
    %v585 = vunpack.c.l.b16 %v514
    %v586 = vunpack.c.l.b16 %v515
    %v587 = vunpack.c.l.b16 %v516
    %v588 = vunpack.c.l.b16 %v517
    %v589 = vunpack.c.l.b16 %v518
    %v590 = vunpack.c.l.b16 %v519
    %v591 = vunpack.c.l.b16 %v520
    %v592 = vunpack.c.l.b16 %v521
    %v593 = vunpack.c.l.b16 %v522
    %v594 = vunpack.c.l.b16 %v523
    %v595 = vunpack.c.l.b16 %v524
    %v596 = vunpack.c.l.b16 %v525
    %v597 = vunpack.c.l.b16 %v526
    %v598 = vunpack.c.l.b16 %v527
    %v599 = vunpack.c.l.b16 %v528
    %v600 = vunpack.c.l.b16 %v529
    %v601 = vunpack.c.l.b16 %v530
    %v602 = vunpack.c.l.b16 %v531
    %v603 = vunpack.c.l.b16 %v532
    %v604 = vunpack.c.l.b16 %v533
    %v605 = vunpack.c.l.b16 %v534
    %v606 = vpack.c.b16 %v575, %v574
    %v607 = vpack.c.b16 %v577, %v576
    %v608 = vpack.c.b16 %v579, %v578
    %v609 = vpack.c.b16 %v581, %v580
    %v610 = vpack.c.b16 %v583, %v582
    %v611 = vpack.c.b16 %v585, %v584
    %v612 = vpack.c.b16 %v587, %v586
    %v613 = vpack.c.b16 %v589, %v588
    %v614 = vpack.c.b16 %v591, %v590
    %v615 = vpack.c.b16 %v593, %v592
    %v616 = vpack.c.b16 %v595, %v594
    %v617 = vpack.c.b16 %v597, %v596
    %v618 = vpack.c.b16 %v599, %v598
    %v619 = vpack.c.b16 %v601, %v600
    %v620 = vpack.c.b16 %v603, %v602
    %v621 = vpack.c.b16 %v605, %v604
    %638 = vmatprep.subr.bf16.mxu0 0
    %639 = vmatpush1.bf16.msra.mxu0 %v606
    %640 = vmatprep.subr.bf16.mxu0 0
    %641 = vmatpush1.bf16.msra.mxu0 %v607
    %642 = vmatprep.subr.bf16.mxu0 0
    %643 = vmatpush1.bf16.msra.mxu0 %v608
    %644 = vmatprep.subr.bf16.mxu0 0
    %645 = vmatpush1.bf16.msra.mxu0 %v609
    %646 = vmatprep.subr.bf16.mxu0 0
    %647 = vmatpush1.bf16.msra.mxu0 %v610
    %648 = vmatprep.subr.bf16.mxu0 0
    %649 = vmatpush1.bf16.msra.mxu0 %v611
    %650 = vmatprep.subr.bf16.mxu0 0
    %651 = vmatpush1.bf16.msra.mxu0 %v612
    %652 = vmatprep.subr.bf16.mxu0 0
    %653 = vmatpush1.bf16.msra.mxu0 %v613
    %654 = vmatprep.subr.bf16.mxu0 0
    %655 = vmatpush1.bf16.msra.mxu0 %v614
    %656 = vmatprep.subr.bf16.mxu0 0
    %657 = vmatpush1.bf16.msra.mxu0 %v615
    %658 = vmatprep.subr.bf16.mxu0 0
    %659 = vmatpush1.bf16.msra.mxu0 %v616
    %660 = vmatprep.subr.bf16.mxu0 0
    %661 = vmatpush1.bf16.msra.mxu0 %v617
    %662 = vmatprep.subr.bf16.mxu0 0
    %663 = vmatpush1.bf16.msra.mxu0 %v618
    %664 = vmatprep.subr.bf16.mxu0 0
    %665 = vmatpush1.bf16.msra.mxu0 %v619
    %666 = vmatprep.subr.bf16.mxu0 0
    %667 = vmatpush1.bf16.msra.mxu0 %v620
    %668 = vmatprep.subr.bf16.mxu0 0
    %669 = vmatpush1.bf16.msra.mxu0 %v621
    %670 = vmatprep.mubr.bf16.mxu0 %v118
    %671 = vmatmul.mubr.bf16.gmra.mrb[0].mxu0 %v117
    %v672 = vpop.f32.mrb[0].mxu0
    %v673 = vadd.f32 %v540, %v672
    %v674 = vpop.f32.mrb[0].mxu0
    %v675 = vpop.f32.mrb[0].mxu0
    %v676 = vpop.f32.mrb[0].mxu0
    %677 = vdwg.mxu0
    %v678 = vmax.f32 %v673, 0.0
    %679 = vst [vmem:[#allocation8] sm:$0xff] %v678
    %v680 = vld [vmem:[%s4] sm:$0xf]
    %v681 = vld [vmem:[%s4 + $0x4] sm:$0xf]
    %v682 = vld [vmem:[%s4 + $0x8] sm:$0xf]
    %v683 = vld [vmem:[%s4 + $0xc] sm:$0xf]
    %v684 = vld [vmem:[%s4 + $0x10] sm:$0xf]
    %v685 = vld [vmem:[%s4 + $0x14] sm:$0xf]
    %v686 = vld [vmem:[%s4 + $0x18] sm:$0xf]
    %v687 = vld [vmem:[%s4 + $0x1c] sm:$0xf]
    %v688 = vld [vmem:[%s4 + $0x20] sm:$0xf]
    %v689 = vld [vmem:[%s4 + $0x24] sm:$0xf]
    %v690 = vld [vmem:[%s4 + $0x28] sm:$0xf]
    %v691 = vld [vmem:[%s4 + $0x2c] sm:$0xf]
    %v692 = vld [vmem:[%s4 + $0x30] sm:$0xf]
    %v693 = vld [vmem:[%s4 + $0x34] sm:$0xf]
    %v694 = vld [vmem:[%s4 + $0x38] sm:$0xf]
    %v695 = vld [vmem:[%s4 + $0x3c] sm:$0xf]
    %v696 = vld [vmem:[%s4 + $0x40] sm:$0xf]
    %v697 = vld [vmem:[%s4 + $0x44] sm:$0xf]
    %v698 = vld [vmem:[%s4 + $0x48] sm:$0xf]
    %v699 = vld [vmem:[%s4 + $0x4c] sm:$0xf]
    %v700 = vld [vmem:[%s4 + $0x50] sm:$0xf]
    %v701 = vld [vmem:[%s4 + $0x54] sm:$0xf]
    %v702 = vld [vmem:[%s4 + $0x58] sm:$0xf]
    %v703 = vld [vmem:[%s4 + $0x5c] sm:$0xf]
    %v704 = vld [vmem:[%s4 + $0x60] sm:$0xf]
    %v705 = vld [vmem:[%s4 + $0x64] sm:$0xf]
    %v706 = vld [vmem:[%s4 + $0x68] sm:$0xf]
    %v707 = vld [vmem:[%s4 + $0x6c] sm:$0xf]
    %v708 = vld [vmem:[%s4 + $0x70] sm:$0xf]
    %v709 = vld [vmem:[%s4 + $0x74] sm:$0xf]
    %v710 = vld [vmem:[%s4 + $0x78] sm:$0xf]
    %v711 = vld [vmem:[%s4 + $0x7c] sm:$0xf]
    %v712 = vld [vmem:[%s10] sm:$0x1]
    %v714 = vlaneseq
    %v715 = vshrl.u32 %v714, 7
    %v716 = vsub.s32 0, %v715
    %v717 = vrot.slane %v712, %v716
    %v751 = vunpack.c.l.b16 %v680
    %v752 = vunpack.c.l.b16 %v681
    %v753 = vunpack.c.l.b16 %v682
    %v754 = vunpack.c.l.b16 %v683
    %v755 = vunpack.c.l.b16 %v684
    %v756 = vunpack.c.l.b16 %v685
    %v757 = vunpack.c.l.b16 %v686
    %v758 = vunpack.c.l.b16 %v687
    %v759 = vunpack.c.l.b16 %v688
    %v760 = vunpack.c.l.b16 %v689
    %v761 = vunpack.c.l.b16 %v690
    %v762 = vunpack.c.l.b16 %v691
    %v763 = vunpack.c.l.b16 %v692
    %v764 = vunpack.c.l.b16 %v693
    %v765 = vunpack.c.l.b16 %v694
    %v766 = vunpack.c.l.b16 %v695
    %v767 = vunpack.c.l.b16 %v696
    %v768 = vunpack.c.l.b16 %v697
    %v769 = vunpack.c.l.b16 %v698
    %v770 = vunpack.c.l.b16 %v699
    %v771 = vunpack.c.l.b16 %v700
    %v772 = vunpack.c.l.b16 %v701
    %v773 = vunpack.c.l.b16 %v702
    %v774 = vunpack.c.l.b16 %v703
    %v775 = vunpack.c.l.b16 %v704
    %v776 = vunpack.c.l.b16 %v705
    %v777 = vunpack.c.l.b16 %v706
    %v778 = vunpack.c.l.b16 %v707
    %v779 = vunpack.c.l.b16 %v708
    %v780 = vunpack.c.l.b16 %v709
    %v781 = vunpack.c.l.b16 %v710
    %v782 = vunpack.c.l.b16 %v711
    %v783 = vpack.c.b16 %v752, %v751
    %v784 = vpack.c.b16 %v754, %v753
    %v785 = vpack.c.b16 %v756, %v755
    %v786 = vpack.c.b16 %v758, %v757
    %v787 = vpack.c.b16 %v760, %v759
    %v788 = vpack.c.b16 %v762, %v761
    %v789 = vpack.c.b16 %v764, %v763
    %v790 = vpack.c.b16 %v766, %v765
    %v791 = vpack.c.b16 %v768, %v767
    %v792 = vpack.c.b16 %v770, %v769
    %v793 = vpack.c.b16 %v772, %v771
    %v794 = vpack.c.b16 %v774, %v773
    %v795 = vpack.c.b16 %v776, %v775
    %v796 = vpack.c.b16 %v778, %v777
    %v797 = vpack.c.b16 %v780, %v779
    %v798 = vpack.c.b16 %v782, %v781
    %815 = vmatprep.subr.bf16.mxu0 0
    %816 = vmatpush1.bf16.msra.mxu0 %v783
    %817 = vmatprep.subr.bf16.mxu0 0
    %818 = vmatpush1.bf16.msra.mxu0 %v784
    %819 = vmatprep.subr.bf16.mxu0 0
    %820 = vmatpush1.bf16.msra.mxu0 %v785
    %821 = vmatprep.subr.bf16.mxu0 0
    %822 = vmatpush1.bf16.msra.mxu0 %v786
    %823 = vmatprep.subr.bf16.mxu0 0
    %824 = vmatpush1.bf16.msra.mxu0 %v787
    %825 = vmatprep.subr.bf16.mxu0 0
    %826 = vmatpush1.bf16.msra.mxu0 %v788
    %827 = vmatprep.subr.bf16.mxu0 0
    %828 = vmatpush1.bf16.msra.mxu0 %v789
    %829 = vmatprep.subr.bf16.mxu0 0
    %830 = vmatpush1.bf16.msra.mxu0 %v790
    %831 = vmatprep.subr.bf16.mxu0 0
    %832 = vmatpush1.bf16.msra.mxu0 %v791
    %833 = vmatprep.subr.bf16.mxu0 0
    %834 = vmatpush1.bf16.msra.mxu0 %v792
    %835 = vmatprep.subr.bf16.mxu0 0
    %836 = vmatpush1.bf16.msra.mxu0 %v793
    %837 = vmatprep.subr.bf16.mxu0 0
    %838 = vmatpush1.bf16.msra.mxu0 %v794
    %839 = vmatprep.subr.bf16.mxu0 0
    %840 = vmatpush1.bf16.msra.mxu0 %v795
    %841 = vmatprep.subr.bf16.mxu0 0
    %842 = vmatpush1.bf16.msra.mxu0 %v796
    %843 = vmatprep.subr.bf16.mxu0 0
    %844 = vmatpush1.bf16.msra.mxu0 %v797
    %845 = vmatprep.subr.bf16.mxu0 0
    %846 = vmatpush1.bf16.msra.mxu0 %v798
    %847 = vmatprep.mubr.bf16.mxu0 %v118
    %848 = vmatmul.mubr.bf16.gmra.mrb[0].mxu0 %v117
    %v849 = vpop.f32.mrb[0].mxu0
    %v850 = vadd.f32 %v717, %v849
    %v851 = vpop.f32.mrb[0].mxu0
    %v852 = vpop.f32.mrb[0].mxu0
    %v853 = vpop.f32.mrb[0].mxu0
    %854 = vdwg.mxu0
    %v855 = vmax.f32 %v850, 0.0
    %vm856 = vcmask 523264
    %857 = vst.msk [vmem:[#allocation9] sm:$0xff] %vm856, %v855
    %v858 = vld [vmem:[%s5] sm:$0xf]
    %v859 = vld [vmem:[%s5 + $0x4] sm:$0xf]
    %v860 = vld [vmem:[%s5 + $0x8] sm:$0xf]
    %v861 = vld [vmem:[%s5 + $0xc] sm:$0xf]
    %v862 = vld [vmem:[%s5 + $0x10] sm:$0xf]
    %v863 = vld [vmem:[%s5 + $0x14] sm:$0xf]
    %v864 = vld [vmem:[%s5 + $0x18] sm:$0xf]
    %v865 = vld [vmem:[%s5 + $0x1c] sm:$0xf]
    %v866 = vld [vmem:[%s5 + $0x20] sm:$0xf]
    %v867 = vld [vmem:[%s5 + $0x24] sm:$0xf]
    %v868 = vld [vmem:[%s5 + $0x28] sm:$0xf]
    %v869 = vld [vmem:[%s5 + $0x2c] sm:$0xf]
    %v870 = vld [vmem:[%s5 + $0x30] sm:$0xf]
    %v871 = vld [vmem:[%s5 + $0x34] sm:$0xf]
    %v872 = vld [vmem:[%s5 + $0x38] sm:$0xf]
    %v873 = vld [vmem:[%s5 + $0x3c] sm:$0xf]
    %v874 = vld [vmem:[%s5 + $0x40] sm:$0xf]
    %v875 = vld [vmem:[%s5 + $0x44] sm:$0xf]
    %v876 = vld [vmem:[%s5 + $0x48] sm:$0xf]
    %v877 = vld [vmem:[%s5 + $0x4c] sm:$0xf]
    %v878 = vld [vmem:[%s5 + $0x50] sm:$0xf]
    %v879 = vld [vmem:[%s5 + $0x54] sm:$0xf]
    %v880 = vld [vmem:[%s5 + $0x58] sm:$0xf]
    %v881 = vld [vmem:[%s5 + $0x5c] sm:$0xf]
    %v882 = vld [vmem:[%s5 + $0x60] sm:$0xf]
    %v883 = vld [vmem:[%s5 + $0x64] sm:$0xf]
    %v884 = vld [vmem:[%s5 + $0x68] sm:$0xf]
    %v885 = vld [vmem:[%s5 + $0x6c] sm:$0xf]
    %v886 = vld [vmem:[%s5 + $0x70] sm:$0xf]
    %v887 = vld [vmem:[%s5 + $0x74] sm:$0xf]
    %v888 = vld [vmem:[%s5 + $0x78] sm:$0xf]
    %v889 = vld [vmem:[%s5 + $0x7c] sm:$0xf]
    %v890 = vld [vmem:[%s11] sm:$0x1]
    %v892 = vlaneseq
    %v893 = vshrl.u32 %v892, 7
    %v894 = vsub.s32 0, %v893
    %v895 = vrot.slane %v890, %v894
    %v929 = vunpack.c.l.b16 %v858
    %v930 = vunpack.c.l.b16 %v859
    %v931 = vunpack.c.l.b16 %v860
    %v932 = vunpack.c.l.b16 %v861
    %v933 = vunpack.c.l.b16 %v862
    %v934 = vunpack.c.l.b16 %v863
    %v935 = vunpack.c.l.b16 %v864
    %v936 = vunpack.c.l.b16 %v865
    %v937 = vunpack.c.l.b16 %v866
    %v938 = vunpack.c.l.b16 %v867
    %v939 = vunpack.c.l.b16 %v868
    %v940 = vunpack.c.l.b16 %v869
    %v941 = vunpack.c.l.b16 %v870
    %v942 = vunpack.c.l.b16 %v871
    %v943 = vunpack.c.l.b16 %v872
    %v944 = vunpack.c.l.b16 %v873
    %v945 = vunpack.c.l.b16 %v874
    %v946 = vunpack.c.l.b16 %v875
    %v947 = vunpack.c.l.b16 %v876
    %v948 = vunpack.c.l.b16 %v877
    %v949 = vunpack.c.l.b16 %v878
    %v950 = vunpack.c.l.b16 %v879
    %v951 = vunpack.c.l.b16 %v880
    %v952 = vunpack.c.l.b16 %v881
    %v953 = vunpack.c.l.b16 %v882
    %v954 = vunpack.c.l.b16 %v883
    %v955 = vunpack.c.l.b16 %v884
    %v956 = vunpack.c.l.b16 %v885
    %v957 = vunpack.c.l.b16 %v886
    %v958 = vunpack.c.l.b16 %v887
    %v959 = vunpack.c.l.b16 %v888
    %v960 = vunpack.c.l.b16 %v889
    %v961 = vpack.c.b16 %v930, %v929
    %v962 = vpack.c.b16 %v932, %v931
    %v963 = vpack.c.b16 %v934, %v933
    %v964 = vpack.c.b16 %v936, %v935
    %v965 = vpack.c.b16 %v938, %v937
    %v966 = vpack.c.b16 %v940, %v939
    %v967 = vpack.c.b16 %v942, %v941
    %v968 = vpack.c.b16 %v944, %v943
    %v969 = vpack.c.b16 %v946, %v945
    %v970 = vpack.c.b16 %v948, %v947
    %v971 = vpack.c.b16 %v950, %v949
    %v972 = vpack.c.b16 %v952, %v951
    %v973 = vpack.c.b16 %v954, %v953
    %v974 = vpack.c.b16 %v956, %v955
    %v975 = vpack.c.b16 %v958, %v957
    %v976 = vpack.c.b16 %v960, %v959
    %993 = vmatprep.subr.bf16.mxu0 0
    %994 = vmatpush1.bf16.msra.mxu0 %v961
    %995 = vmatprep.subr.bf16.mxu0 0
    %996 = vmatpush1.bf16.msra.mxu0 %v962
    %997 = vmatprep.subr.bf16.mxu0 0
    %998 = vmatpush1.bf16.msra.mxu0 %v963
    %999 = vmatprep.subr.bf16.mxu0 0
    %1000 = vmatpush1.bf16.msra.mxu0 %v964
    %1001 = vmatprep.subr.bf16.mxu0 0
    %1002 = vmatpush1.bf16.msra.mxu0 %v965
    %1003 = vmatprep.subr.bf16.mxu0 0
    %1004 = vmatpush1.bf16.msra.mxu0 %v966
    %1005 = vmatprep.subr.bf16.mxu0 0
    %1006 = vmatpush1.bf16.msra.mxu0 %v967
    %1007 = vmatprep.subr.bf16.mxu0 0
    %1008 = vmatpush1.bf16.msra.mxu0 %v968
    %1009 = vmatprep.subr.bf16.mxu0 0
    %1010 = vmatpush1.bf16.msra.mxu0 %v969
    %1011 = vmatprep.subr.bf16.mxu0 0
    %1012 = vmatpush1.bf16.msra.mxu0 %v970
    %1013 = vmatprep.subr.bf16.mxu0 0
    %1014 = vmatpush1.bf16.msra.mxu0 %v971
    %1015 = vmatprep.subr.bf16.mxu0 0
    %1016 = vmatpush1.bf16.msra.mxu0 %v972
    %1017 = vmatprep.subr.bf16.mxu0 0
    %1018 = vmatpush1.bf16.msra.mxu0 %v973
    %1019 = vmatprep.subr.bf16.mxu0 0
    %1020 = vmatpush1.bf16.msra.mxu0 %v974
    %1021 = vmatprep.subr.bf16.mxu0 0
    %1022 = vmatpush1.bf16.msra.mxu0 %v975
    %1023 = vmatprep.subr.bf16.mxu0 0
    %1024 = vmatpush1.bf16.msra.mxu0 %v976
    %1025 = vmatprep.mubr.bf16.mxu0 %v118
    %1026 = vmatmul.mubr.bf16.gmra.mrb[0].mxu0 %v117
    %v1027 = vpop.f32.mrb[0].mxu0
    %v1028 = vadd.f32 %v895, %v1027
    %v1029 = vpop.f32.mrb[0].mxu0
    %v1030 = vpop.f32.mrb[0].mxu0
    %v1031 = vpop.f32.mrb[0].mxu0
    %1032 = vdwg.mxu0
    %v1033 = vmax.f32 %v1028, 0.0
    %vm1034 = vcmask 261120
    %1035 = vst.msk [vmem:[#allocation11] sm:$0xff] %vm1034, %v1033
    %v1036 = vld [vmem:[%s6] sm:$0xf]
    %v1037 = vld [vmem:[%s6 + $0x4] sm:$0xf]
    %v1038 = vld [vmem:[%s6 + $0x8] sm:$0xf]
    %v1039 = vld [vmem:[%s6 + $0xc] sm:$0xf]
    %v1040 = vld [vmem:[%s6 + $0x10] sm:$0xf]
    %v1041 = vld [vmem:[%s6 + $0x14] sm:$0xf]
    %v1042 = vld [vmem:[%s6 + $0x18] sm:$0xf]
    %v1043 = vld [vmem:[%s6 + $0x1c] sm:$0xf]
    %v1044 = vld [vmem:[%s6 + $0x20] sm:$0xf]
    %v1045 = vld [vmem:[%s6 + $0x24] sm:$0xf]
    %v1046 = vld [vmem:[%s6 + $0x28] sm:$0xf]
    %v1047 = vld [vmem:[%s6 + $0x2c] sm:$0xf]
    %v1048 = vld [vmem:[%s6 + $0x30] sm:$0xf]
    %v1049 = vld [vmem:[%s6 + $0x34] sm:$0xf]
    %v1050 = vld [vmem:[%s6 + $0x38] sm:$0xf]
    %v1051 = vld [vmem:[%s6 + $0x3c] sm:$0xf]
    %v1052 = vld [vmem:[%s6 + $0x40] sm:$0xf]
    %v1053 = vld [vmem:[%s6 + $0x44] sm:$0xf]
    %v1054 = vld [vmem:[%s6 + $0x48] sm:$0xf]
    %v1055 = vld [vmem:[%s6 + $0x4c] sm:$0xf]
    %v1056 = vld [vmem:[%s6 + $0x50] sm:$0xf]
    %v1057 = vld [vmem:[%s6 + $0x54] sm:$0xf]
    %v1058 = vld [vmem:[%s6 + $0x58] sm:$0xf]
    %v1059 = vld [vmem:[%s6 + $0x5c] sm:$0xf]
    %v1060 = vld [vmem:[%s6 + $0x60] sm:$0xf]
    %v1061 = vld [vmem:[%s6 + $0x64] sm:$0xf]
    %v1062 = vld [vmem:[%s6 + $0x68] sm:$0xf]
    %v1063 = vld [vmem:[%s6 + $0x6c] sm:$0xf]
    %v1064 = vld [vmem:[%s6 + $0x70] sm:$0xf]
    %v1065 = vld [vmem:[%s6 + $0x74] sm:$0xf]
    %v1066 = vld [vmem:[%s6 + $0x78] sm:$0xf]
    %v1067 = vld [vmem:[%s6 + $0x7c] sm:$0xf]
    %v1068 = vld [vmem:[%s12] sm:$0x1]
    %v1070 = vlaneseq
    %v1071 = vshrl.u32 %v1070, 7
    %v1072 = vsub.s32 0, %v1071
    %v1073 = vrot.slane %v1068, %v1072
    %v1107 = vunpack.c.l.b16 %v1036
    %v1108 = vunpack.c.l.b16 %v1037
    %v1109 = vunpack.c.l.b16 %v1038
    %v1110 = vunpack.c.l.b16 %v1039
    %v1111 = vunpack.c.l.b16 %v1040
    %v1112 = vunpack.c.l.b16 %v1041
    %v1113 = vunpack.c.l.b16 %v1042
    %v1114 = vunpack.c.l.b16 %v1043
    %v1115 = vunpack.c.l.b16 %v1044
    %v1116 = vunpack.c.l.b16 %v1045
    %v1117 = vunpack.c.l.b16 %v1046
    %v1118 = vunpack.c.l.b16 %v1047
    %v1119 = vunpack.c.l.b16 %v1048
    %v1120 = vunpack.c.l.b16 %v1049
    %v1121 = vunpack.c.l.b16 %v1050
    %v1122 = vunpack.c.l.b16 %v1051
    %v1123 = vunpack.c.l.b16 %v1052
    %v1124 = vunpack.c.l.b16 %v1053
    %v1125 = vunpack.c.l.b16 %v1054
    %v1126 = vunpack.c.l.b16 %v1055
    %v1127 = vunpack.c.l.b16 %v1056
    %v1128 = vunpack.c.l.b16 %v1057
    %v1129 = vunpack.c.l.b16 %v1058
    %v1130 = vunpack.c.l.b16 %v1059
    %v1131 = vunpack.c.l.b16 %v1060
    %v1132 = vunpack.c.l.b16 %v1061
    %v1133 = vunpack.c.l.b16 %v1062
    %v1134 = vunpack.c.l.b16 %v1063
    %v1135 = vunpack.c.l.b16 %v1064
    %v1136 = vunpack.c.l.b16 %v1065
    %v1137 = vunpack.c.l.b16 %v1066
    %v1138 = vunpack.c.l.b16 %v1067
    %v1139 = vpack.c.b16 %v1108, %v1107
    %v1140 = vpack.c.b16 %v1110, %v1109
    %v1141 = vpack.c.b16 %v1112, %v1111
    %v1142 = vpack.c.b16 %v1114, %v1113
    %v1143 = vpack.c.b16 %v1116, %v1115
    %v1144 = vpack.c.b16 %v1118, %v1117
    %v1145 = vpack.c.b16 %v1120, %v1119
    %v1146 = vpack.c.b16 %v1122, %v1121
    %v1147 = vpack.c.b16 %v1124, %v1123
    %v1148 = vpack.c.b16 %v1126, %v1125
    %v1149 = vpack.c.b16 %v1128, %v1127
    %v1150 = vpack.c.b16 %v1130, %v1129
    %v1151 = vpack.c.b16 %v1132, %v1131
    %v1152 = vpack.c.b16 %v1134, %v1133
    %v1153 = vpack.c.b16 %v1136, %v1135
    %v1154 = vpack.c.b16 %v1138, %v1137
    %1171 = vmatprep.subr.bf16.mxu0 0
    %1172 = vmatpush1.bf16.msra.mxu0 %v1139
    %1173 = vmatprep.subr.bf16.mxu0 0
    %1174 = vmatpush1.bf16.msra.mxu0 %v1140
    %1175 = vmatprep.subr.bf16.mxu0 0
    %1176 = vmatpush1.bf16.msra.mxu0 %v1141
    %1177 = vmatprep.subr.bf16.mxu0 0
    %1178 = vmatpush1.bf16.msra.mxu0 %v1142
    %1179 = vmatprep.subr.bf16.mxu0 0
    %1180 = vmatpush1.bf16.msra.mxu0 %v1143
    %1181 = vmatprep.subr.bf16.mxu0 0
    %1182 = vmatpush1.bf16.msra.mxu0 %v1144
    %1183 = vmatprep.subr.bf16.mxu0 0
    %1184 = vmatpush1.bf16.msra.mxu0 %v1145
    %1185 = vmatprep.subr.bf16.mxu0 0
    %1186 = vmatpush1.bf16.msra.mxu0 %v1146
    %1187 = vmatprep.subr.bf16.mxu0 0
    %1188 = vmatpush1.bf16.msra.mxu0 %v1147
    %1189 = vmatprep.subr.bf16.mxu0 0
    %1190 = vmatpush1.bf16.msra.mxu0 %v1148
    %1191 = vmatprep.subr.bf16.mxu0 0
    %1192 = vmatpush1.bf16.msra.mxu0 %v1149
    %1193 = vmatprep.subr.bf16.mxu0 0
    %1194 = vmatpush1.bf16.msra.mxu0 %v1150
    %1195 = vmatprep.subr.bf16.mxu0 0
    %1196 = vmatpush1.bf16.msra.mxu0 %v1151
    %1197 = vmatprep.subr.bf16.mxu0 0
    %1198 = vmatpush1.bf16.msra.mxu0 %v1152
    %1199 = vmatprep.subr.bf16.mxu0 0
    %1200 = vmatpush1.bf16.msra.mxu0 %v1153
    %1201 = vmatprep.subr.bf16.mxu0 0
    %1202 = vmatpush1.bf16.msra.mxu0 %v1154
    %1203 = vmatprep.mubr.bf16.mxu0 %v118
    %1204 = vmatmul.mubr.bf16.gmra.mrb[0].mxu0 %v117
    %v1205 = vpop.f32.mrb[0].mxu0
    %v1206 = vadd.f32 %v1073, %v1205
    %v1207 = vpop.f32.mrb[0].mxu0
    %v1208 = vpop.f32.mrb[0].mxu0
    %v1209 = vpop.f32.mrb[0].mxu0
    %1210 = vdwg.mxu0
    %v1211 = vmax.f32 %v1206, 0.0
    %vm1212 = vcmask 130048
    %1213 = vst.msk [vmem:[#allocation12] sm:$0xff] %vm1212, %v1211
    // Predicated region
    $region58: #{tpu_custom_call.1} parent=1 // pred_check
      _
    $region59: #{tpu_custom_call.1} parent=1 // pred_check_branch
      %1215 = sbr.rel (0) target = $region61
    $region60: #{tpu_custom_call.1} parent=1 // pred_region
      %s1217 = ssub.s32 256, 256
      %1218 = vsyncadd [#allocation4], %s1217
      %s1220 = sshll.u32 [#allocation5], 4
      %s1221 = int_to_ptr.vmem [resolvable:$true] %s1220
      %1223 = dma.vmem_to_hbm [thread:$0]  %s1221, 256, %s13, [#allocation4]
    $region61: #{tpu_custom_call.1} parent=1 // pred_fallthru
      _
    // Predicated region
    $region62: #{tpu_custom_call.1} parent=1 // pred_check
      _
    $region63: #{tpu_custom_call.1} parent=1 // pred_check_branch
      %1225 = sbr.rel (0) target = $region65
    $region64: #{tpu_custom_call.1} parent=1 // pred_region
      %s1227 = ssub.s32 128, 128
      %1228 = vsyncadd [#allocation7], %s1227
      %s1230 = sshll.u32 [#allocation6], 4
      %s1231 = int_to_ptr.vmem [resolvable:$true] %s1230
      %1233 = dma.vmem_to_hbm [thread:$0]  %s1231, 128, %s14, [#allocation7]
    $region65: #{tpu_custom_call.1} parent=1 // pred_fallthru
      _
    // Predicated region
    $region66: #{tpu_custom_call.1} parent=1 // pred_check
      _
    $region67: #{tpu_custom_call.1} parent=1 // pred_check_branch
      %1235 = sbr.rel (0) target = $region69
    $region68: #{tpu_custom_call.1} parent=1 // pred_region
      %s1237 = ssub.s32 128, 128
      %1238 = vsyncadd [#allocation7], %s1237
      %s1240 = sshll.u32 [#allocation8], 4
      %s1241 = int_to_ptr.vmem [resolvable:$true] %s1240
      %1243 = dma.vmem_to_hbm [thread:$0]  %s1241, 128, %s15, [#allocation7]
    $region69: #{tpu_custom_call.1} parent=1 // pred_fallthru
      _
    // Predicated region
    $region70: #{tpu_custom_call.1} parent=1 // pred_check
      _
    $region71: #{tpu_custom_call.1} parent=1 // pred_check_branch
      %1245 = sbr.rel (0) target = $region73
    $region72: #{tpu_custom_call.1} parent=1 // pred_region
      %s1247 = ssub.s32 128, 128
      %1248 = vsyncadd [#allocation10], %s1247
      %s1250 = sshll.u32 [#allocation9], 4
      %s1251 = int_to_ptr.vmem [resolvable:$true] %s1250
      %1253 = dma.vmem_to_hbm [thread:$0]  %s1251, 128, %s16, [#allocation10]
    $region73: #{tpu_custom_call.1} parent=1 // pred_fallthru
      _
    // Predicated region
    $region74: #{tpu_custom_call.1} parent=1 // pred_check
      _
    $region75: #{tpu_custom_call.1} parent=1 // pred_check_branch
      %1255 = sbr.rel (0) target = $region77
    $region76: #{tpu_custom_call.1} parent=1 // pred_region
      %s1257 = ssub.s32 128, 128
      %1258 = vsyncadd [#allocation10], %s1257
      %s1260 = sshll.u32 [#allocation11], 4
      %s1261 = int_to_ptr.vmem [resolvable:$true] %s1260
      %1263 = dma.vmem_to_hbm [thread:$0]  %s1261, 128, %s17, [#allocation10]
    $region77: #{tpu_custom_call.1} parent=1 // pred_fallthru
      _
    // Predicated region
    $region78: #{tpu_custom_call.1} parent=1 // pred_check
      _
    $region79: #{tpu_custom_call.1} parent=1 // pred_check_branch
      %1265 = sbr.rel (0) target = $region81
    $region80: #{tpu_custom_call.1} parent=1 // pred_region
      %s1267 = ssub.s32 128, 128
      %1268 = vsyncadd [#allocation13], %s1267
      %s1270 = sshll.u32 [#allocation12], 4
      %s1271 = int_to_ptr.vmem [resolvable:$true] %s1270
      %1273 = dma.vmem_to_hbm [thread:$0]  %s1271, 128, %s18, [#allocation13]
    $region81: #{tpu_custom_call.1} parent=1 // pred_fallthru
      _
    // Predicated region
    $region82: #{tpu_custom_call.1} parent=1 // pred_check
      _
    $region83: #{tpu_custom_call.1} parent=1 // pred_check_branch
      %1275 = sbr.rel (0) target = $region85
    $region84: #{tpu_custom_call.1} parent=1 // pred_region
      %1276 = dma.done [#allocation4], 256
    $region85: #{tpu_custom_call.1} parent=1 // pred_fallthru
      _
    // Predicated region
    $region86: #{tpu_custom_call.1} parent=1 // pred_check
      _
    $region87: #{tpu_custom_call.1} parent=1 // pred_check_branch
      %1278 = sbr.rel (0) target = $region89
    $region88: #{tpu_custom_call.1} parent=1 // pred_region
      %1279 = dma.done [#allocation7], 128
    $region89: #{tpu_custom_call.1} parent=1 // pred_fallthru
      _
    // Predicated region
    $region90: #{tpu_custom_call.1} parent=1 // pred_check
      _
    $region91: #{tpu_custom_call.1} parent=1 // pred_check_branch
      %1281 = sbr.rel (0) target = $region93
    $region92: #{tpu_custom_call.1} parent=1 // pred_region
      %1282 = dma.done [#allocation7], 128
    $region93: #{tpu_custom_call.1} parent=1 // pred_fallthru
      _
    // Predicated region
    $region94: #{tpu_custom_call.1} parent=1 // pred_check
      _
    $region95: #{tpu_custom_call.1} parent=1 // pred_check_branch
      %1284 = sbr.rel (0) target = $region97
    $region96: #{tpu_custom_call.1} parent=1 // pred_region
      %1285 = dma.done [#allocation10], 128
    $region97: #{tpu_custom_call.1} parent=1 // pred_fallthru
      _
    // Predicated region
    $region98: #{tpu_custom_call.1} parent=1 // pred_check
      _
    $region99: #{tpu_custom_call.1} parent=1 // pred_check_branch
      %1287 = sbr.rel (0) target = $region101
    $region100: #{tpu_custom_call.1} parent=1 // pred_region
      %1288 = dma.done [#allocation10], 128
    $region101: #{tpu_custom_call.1} parent=1 // pred_fallthru
      _
    // Predicated region
    $region102: #{tpu_custom_call.1} parent=1 // pred_check
      _
    $region103: #{tpu_custom_call.1} parent=1 // pred_check_branch
      %1290 = sbr.rel (0) target = $region105
    $region104: #{tpu_custom_call.1} parent=1 // pred_region
      %1291 = dma.done [#allocation13], 128
    $region105: #{tpu_custom_call.1} parent=1 // pred_fallthru
      _
    %1292 = vsyncpa [#allocation3], 1
    %1293 = vsyncpa [#allocation4], 1
    %1294 = vsyncpa [#allocation7], 1
    %1295 = vsyncpa [#allocation10], 1
    %1296 = vsyncpa [#allocation13], 1

</llo_original>
